<compile_context>
chip_gen: v7x
topology: tpu7x:2x2x1
jax: 0.10.0
libtpu: 0.0.40
codegen_flags: <defaults>
</compile_context>

<pallas_src>
import functools
import math

import jax
import jax.numpy as jnp
from jax.experimental import pallas as pl
from jax.experimental.pallas import tpu as pltpu

_MIB = 1024 * 1024


# ---------------------------------------------------------------------------
# forward: std = exp(log_std)
# ---------------------------------------------------------------------------
def isotropic_gaussian_forward(embeddings, log_std):
    """Mirrors IsotropicGaussianSurrogate.forward (ignores embeddings)."""
    del embeddings  # unused, exactly like the PyTorch _forward_impl
    return {"std": jnp.exp(log_std.astype(jnp.float32))}


# ---------------------------------------------------------------------------
# log_pdf kernel
#   residuals        = noisy[:, None, :] - candidates            [B, C, d]
#   squared_distance = sum(residuals**2, axis=-1)                [B, C]
#   log_pdf          = norm_const - squared_distance * 1/(2*var) [B, C]
# ---------------------------------------------------------------------------
def _log_pdf_kernel(scalars_ref, noisy_ref, cand_ref, out_ref, *, d_chunk):
    # scalars_ref: SMEM (2,) f32 -> [norm_const, inv_two_var]   (scalar path)
    # noisy_ref:   VMEM (Bt, d)      native dtype
    # cand_ref:    VMEM (Bt, Ct, d)  native dtype
    # out_ref:     VMEM (Bt, Ct)     f32
    norm_const = scalars_ref[0]
    inv_two_var = scalars_ref[1]

    bt, ct, d = cand_ref.shape
    acc = jnp.zeros((bt, ct), jnp.float32)

    # Chunked d-reduction: static (trace-time) slices at 128-lane-aligned
    # offsets; the serial dependence through `acc` keeps each chunk's f32
    # temporaries (resid, resid**2) small and short-lived instead of a full
    # (Bt, Ct, d) f32 materialization.
    for start in range(0, d, d_chunk):
        size = min(d_chunk, d - start)
        n_chunk = noisy_ref[:, start:start + size].astype(jnp.float32)      # (Bt, size)
        c_chunk = cand_ref[:, :, start:start + size].astype(jnp.float32)    # (Bt, Ct, size)
        resid = n_chunk[:, None, :] - c_chunk                               # VPU subtract
        acc = acc + jnp.sum(resid * resid, axis=-1)                         # VPU mul + XLU reduce

    out_ref[...] = norm_const - acc * inv_two_var


def _choose_tiles(B, C, d, itemsize):
    """Pick (Bt, Ct, d_chunk) with lane-dense C tiles and a ~4 MiB cand budget."""
    tile_bytes = 4 * _MIB                       # candidate-tile budget (native dtype)
    sub_q = max(8, 32 // itemsize)              # packed sublane quantum: 8/16/32

    # Start Bt at one packed sublane group (or full B if smaller).
    Bt = B if B < sub_q else sub_q

    # Ct: multiple of 128 (lane-dense output stores) when C allows.
    if C >= 128:
        cols_budget = tile_bytes // max(1, Bt * d * itemsize)
        Ct = max(128, min(512, (cols_budget // 128) * 128, (C // 128) * 128))
    else:
        Ct = C

    # Grow Bt if the budget allows and B is big enough.
    if B >= sub_q:
        rows_budget = tile_bytes // max(1, Ct * d * itemsize)
        Bt = min((B // sub_q) * sub_q, max(sub_q, (rows_budget // sub_q) * sub_q))

    # Keep enough grid steps for v7x's 2 TensorCores + pipeline ramp.
    while pl.cdiv(B, Bt) * pl.cdiv(C, Ct) < 8 and (Ct > 128 or Bt > sub_q):
        if Ct > 128:
            Ct -= 128
        else:
            Bt = max(sub_q, ((Bt // 2) // sub_q) * sub_q)

    # d-chunk: multiple of 128 lanes, sized so (Bt, Ct, d_chunk) f32 temps ~1 MiB.
    d_chunk = max(128, ((_MIB // max(1, Bt * Ct * 4)) // 128) * 128)
    d_chunk = min(d_chunk, ((d + 127) // 128) * 128)
    return Bt, Ct, d_chunk


def isotropic_gaussian_log_pdf(noisy_embeddings, candidate_embeddings, noise_stats):
    """Mirrors IsotropicGaussianSurrogate.log_pdf with a tiled, pipelined kernel."""
    B, C, d = candidate_embeddings.shape
    itemsize = jnp.dtype(candidate_embeddings.dtype).itemsize

    # Precompute the two scalars in f32 on the wrapper side; the kernel reads
    # them from SMEM (scalar prefetch) -- no in-kernel log / reciprocal.
    std = noise_stats["std"].reshape(()).astype(jnp.float32)
    var = std * std
    norm_const = -(d / 2.0) * jnp.log(2.0 * math.pi * var)
    inv_two_var = 0.5 / var
    scalars = jnp.stack([norm_const, inv_two_var]).astype(jnp.float32)

    Bt, Ct, d_chunk = _choose_tiles(B, C, d, itemsize)
    grid = (pl.cdiv(B, Bt), pl.cdiv(C, Ct))

    # Explicit scoped-VMEM limit: double-buffered cand/noisy/out blocks plus
    # the chunk-sized f32 temporaries, with margin.  Safe on v5e (16 MiB
    # default), v6e (32 MiB default) and v7x (64 MiB physical per TC).
    est = (2 * (Bt * Ct * d + Bt * d) * itemsize      # double-buffered inputs
           + 2 * Bt * Ct * 4                          # double-buffered output
           + 2 * Bt * Ct * min(d_chunk, d) * 4        # resid / resid**2 temps
           + Bt * Ct * 4                              # accumulator
           + 2 * _MIB)                                # misc / margin
    vmem_limit = int(min(max(32 * _MIB, est), 64 * _MIB))

    cost = pl.CostEstimate(
        flops=3 * B * C * d,
        transcendentals=0,
        bytes_accessed=B * C * d * itemsize + B * d * itemsize + B * C * 4,
    )

    kernel = functools.partial(_log_pdf_kernel, d_chunk=d_chunk)

    return pl.pallas_call(
        kernel,
        out_shape=jax.ShapeDtypeStruct((B, C), jnp.float32),
        grid_spec=pltpu.PrefetchScalarGridSpec(
            num_scalar_prefetch=1,                    # scalars -> SMEM
            grid=grid,
            in_specs=[
                # noisy embeddings [B, d] -> (Bt, d) tiles, reused across C tiles
                pl.BlockSpec((Bt, d), lambda bi, ci, s: (bi, 0)),
                # candidate embeddings [B, C, d] -> (Bt, Ct, d) tiles
                pl.BlockSpec((Bt, Ct, d), lambda bi, ci, s: (bi, ci, 0)),
            ],
            out_specs=pl.BlockSpec((Bt, Ct), lambda bi, ci, s: (bi, ci)),
        ),
        compiler_params=pltpu.CompilerParams(
            dimension_semantics=("parallel", "parallel"),
            vmem_limit_bytes=vmem_limit,
        ),
        cost_estimate=cost,
    )(scalars, noisy_embeddings, candidate_embeddings)


# ---------------------------------------------------------------------------
# Pure-JAX reference (for self-checking)
# ---------------------------------------------------------------------------
def _log_pdf_ref(noisy, cand, std):
    noisy = noisy.astype(jnp.float32)
    cand = cand.astype(jnp.float32)
    var = std.astype(jnp.float32) ** 2
    resid = noisy[:, None, :] - cand
    sq = jnp.sum(resid**2, axis=-1)
    d = cand.shape[-1]
    norm_const = -(d / 2.0) * jnp.log(2.0 * math.pi * var)
    return norm_const - sq / (2.0 * var)


if __name__ == "__main__":
    key = jax.random.PRNGKey(0)
    k_emb, k_noisy, k_cand, k_noisy2, k_cand2 = jax.random.split(key, 5)

    # Module parameter (default initial_std -> log(0.3)), deterministic.
    log_std = jnp.log(jnp.ones((1,), dtype=jnp.float32) * 0.3)

    # Small shapes consistent with the module docstring [B, Z, C, d].
    B, Z, C, d = 2, 4, 8, 32
    embeddings = jax.random.normal(k_emb, (B, Z, C, d), dtype=jnp.float32)

    # --- forward pass ---
    out = isotropic_gaussian_forward(embeddings, log_std)
    std = jax.block_until_ready(out["std"])
    assert std.shape == (1,)
    assert jnp.allclose(std, jnp.exp(log_std), atol=1e-6), "forward mismatch"

    # --- log_pdf hot path, tiny f32 case (single block) ---
    noisy = jax.random.normal(k_noisy, (B, d), dtype=jnp.float32)
    cand = jax.random.normal(k_cand, (B, C, d), dtype=jnp.float32)
    logp = jax.block_until_ready(
        isotropic_gaussian_log_pdf(noisy, cand, {"std": std})
    )
    logp_ref = _log_pdf_ref(noisy, cand, std[0])
    assert logp.shape == (B, C)
    assert jnp.allclose(logp, logp_ref, rtol=1e-5, atol=1e-5), "log_pdf mismatch"

    # --- log_pdf with native bf16 inputs, multi-tile grid + ragged C block ---
    B2, C2, d2 = 4, 320, 160
    noisy_bf = jax.random.normal(k_noisy2, (B2, d2), dtype=jnp.float32).astype(jnp.bfloat16)
    cand_bf = jax.random.normal(k_cand2, (B2, C2, d2), dtype=jnp.float32).astype(jnp.bfloat16)
    logp_bf = jax.block_until_ready(
        isotropic_gaussian_log_pdf(noisy_bf, cand_bf, {"std": std})
    )
    logp_bf_ref = _log_pdf_ref(noisy_bf, cand_bf, std[0])
    assert logp_bf.shape == (B2, C2)
    assert jnp.allclose(logp_bf, logp_bf_ref, rtol=5e-3, atol=5e-2), "bf16 log_pdf mismatch"

    print("KERNEL_OK")
</pallas_src>

<mosaic_0001>
module attributes {stable_mosaic.version = 11 : i64} {
  func.func @_log_pdf_kernel(%arg0: i32, %arg1: i32, %arg2: memref<2xf32, #tpu.memory_space<smem>>, %arg3: memref<2x32xf32, #tpu.memory_space<vmem>>, %arg4: memref<2x8x32xf32, #tpu.memory_space<vmem>>, %arg5: memref<2x8xf32, #tpu.memory_space<vmem>>) attributes {dimension_semantics = [#tpu.dimension_semantics<parallel>, #tpu.dimension_semantics<parallel>], iteration_bounds = array<i64: 1, 1>, scalar_prefetch = 1 : i64, scratch_operands = 0 : i64, tpu.core_type = #tpu.core_type<tc>, window_params = [{transform_indices = @transform_0, window_bounds = array<i64: 2, 32>}, {transform_indices = @transform_1, window_bounds = array<i64: 2, 8, 32>}, {transform_indices = @transform_2, window_bounds = array<i64: 2, 8>}]} {
    %c0 = arith.constant 0 : index
    %0 = memref.load %arg2[%c0] : memref<2xf32, #tpu.memory_space<smem>>
    %c1 = arith.constant 1 : index
    %1 = memref.load %arg2[%c1] : memref<2xf32, #tpu.memory_space<smem>>
    %cst = arith.constant 0.000000e+00 : f32
    %2 = vector.broadcast %cst : f32 to vector<2x8xf32>
    %c0_0 = arith.constant 0 : index
    %c0_1 = arith.constant 0 : index
    %3 = vector.load %arg3[%c0_0, %c0_1] : memref<2x32xf32, #tpu.memory_space<vmem>>, vector<2x32xf32>
    %c0_2 = arith.constant 0 : index
    %c0_3 = arith.constant 0 : index
    %c0_4 = arith.constant 0 : index
    %4 = vector.load %arg4[%c0_2, %c0_3, %c0_4] : memref<2x8x32xf32, #tpu.memory_space<vmem>>, vector<2x8x32xf32>
    %5 = vector.shape_cast %3 : vector<2x32xf32> to vector<2x1x32xf32>
    %6 = vector.broadcast %5 : vector<2x1x32xf32> to vector<2x8x32xf32>
    %7 = arith.subf %6, %4 : vector<2x8x32xf32>
    %8 = arith.mulf %7, %7 : vector<2x8x32xf32>
    %cst_5 = arith.constant dense<0.000000e+00> : vector<2x8xf32>
    %9 = vector.multi_reduction <add>, %8, %cst_5 [2] : vector<2x8x32xf32> to vector<2x8xf32>
    %10 = arith.addf %2, %9 : vector<2x8xf32>
    %11 = vector.broadcast %1 : f32 to vector<2x8xf32>
    %12 = arith.mulf %10, %11 : vector<2x8xf32>
    %13 = vector.broadcast %0 : f32 to vector<2x8xf32>
    %14 = arith.subf %13, %12 : vector<2x8xf32>
    %c0_6 = arith.constant 0 : index
    %c0_7 = arith.constant 0 : index
    %15 = vector.load %arg5[%c0_6, %c0_7] : memref<2x8xf32, #tpu.memory_space<vmem>>, vector<2x8xf32>
    tpu.vector_store %arg5[%c0_6, %c0_7], %14 {strides = array<i32>} : memref<2x8xf32, #tpu.memory_space<vmem>>, vector<2x8xf32>,
    return
  }
  func.func @transform_0(%arg0: i32, %arg1: i32, %arg2: memref<2xf32, #tpu.memory_space<smem>>) -> (i32, i32) {
    %c0_i32 = arith.constant 0 : i32
    %c0_i32_0 = arith.constant 0 : i32
    return %arg0, %c0_i32 : i32, i32
  }
  func.func @transform_1(%arg0: i32, %arg1: i32, %arg2: memref<2xf32, #tpu.memory_space<smem>>) -> (i32, i32, i32) {
    %c0_i32 = arith.constant 0 : i32
    %c0_i32_0 = arith.constant 0 : i32
    return %arg0, %arg1, %c0_i32 : i32, i32, i32
  }
  func.func @transform_2(%arg0: i32, %arg1: i32, %arg2: memref<2xf32, #tpu.memory_space<smem>>) -> (i32, i32) {
    %c0_i32 = arith.constant 0 : i32
    return %arg0, %arg1 : i32, i32
  }
}

</mosaic_0001>

<llo_original>
// kernel: tpu_custom_call.1
$region0: #{tpu_custom_call.1}
  #allocation0 [shape = 'u32[]', space=smem, size = 0x4, offset = 0x4, fixed_abs, tag = 'smem constant byte address 0x4 - core index']
  #allocation1 [shape = 'u32[144,128]{1,0:T(1,128)}', space=vmem, size = 0x12000, scoped, tag = 'internal scratch']
  #allocation2 [shape = 's32[1]{0}', space=sflag, size = 0x4, scoped, tag = 'scoped memory for tpu_custom_call.1']
  #allocation3 [shape = 'u8[512]{0}', space=smem, size = 0x200, scoped, tag = 'prefetched SMEM operand 0']
  %s0 = inlined_call_operand.hbm [shape: f32[2], index: 0, kind: input, shape index: {}]
  %s1 = inlined_call_operand.vmem [shape: f32[2,32], index: 1, kind: input, shape index: {}]
  %s2 = inlined_call_operand.hbm [shape: f32[2,8,32], index: 2, kind: input, shape index: {}]
  %s3 = inlined_call_operand.hbm [shape: f32[2,8], index: 3, kind: output, shape index: {}]
  %s4 = sld [smem:[#allocation0]]
  $region22: #{tpu_custom_call.1} parent=0
    _
  %s6 = ssub.s32 1, %s4
  %s7 = scalar_select 0, %s6, %s4
  %9 = dma.hbm_to_smem %s0, 16, [#allocation3], [#allocation2]
  %10 = dma.done [#allocation2], 16
  %11 = sfence
  $region1: #{tpu_custom_call.1} parent=0
    #allocation4 [shape = 'u8[8192]{0}', space=vmem, size = 0x2000, scoped, tag = 'input window, operand 2, single buffered']
    #allocation5 [shape = 's32[1]{0}', space=sflag, size = 0x4, scoped, tag = 'scoped memory for tpu_custom_call.1']
    #allocation6 [shape = 's32[1]{0}', space=sflag, size = 0x4, scoped, tag = 'scoped memory for tpu_custom_call.1']
    #allocation7 [shape = 'u8[1024]{0}', space=vmem, size = 0x400, scoped, tag = 'output window, operand 0, single buffered']
    %12 = vsyncpa [#allocation5], 0
    %13 = vsyncpa [#allocation6], 0
    // Predicated region
    $region2: #{tpu_custom_call.1} parent=1 // pred_check
      _
    $region3: #{tpu_custom_call.1} parent=1 // pred_check_branch
      %15 = sbr.rel (0) target = $region5
    $region4: #{tpu_custom_call.1} parent=1 // pred_region
      _
    $region5: #{tpu_custom_call.1} parent=1 // pred_fallthru
      _
    // Predicated region
    $region6: #{tpu_custom_call.1} parent=1 // pred_check
      _
    $region7: #{tpu_custom_call.1} parent=1 // pred_check_branch
      %17 = sbr.rel (0) target = $region9
    $region8: #{tpu_custom_call.1} parent=1 // pred_region
      %s19 = ssub.s32 256, 256
      %20 = vsyncadd [#allocation5], %s19
      %s21 = sshll.u32 [#allocation4], 4
      %s22 = int_to_ptr.vmem [resolvable:$true] %s21
      %27 = dma.hbm_to_vmem [thread:$0]  %s2, 256, %s22, [#allocation5], 128, 128, 8
    $region9: #{tpu_custom_call.1} parent=1 // pred_fallthru
      _
    // Predicated region
    $region10: #{tpu_custom_call.1} parent=1 // pred_check
      _
    $region11: #{tpu_custom_call.1} parent=1 // pred_check_branch
      %29 = sbr.rel (0) target = $region13
    $region12: #{tpu_custom_call.1} parent=1 // pred_region
      %30 = dma.done [#allocation5], 256
    $region13: #{tpu_custom_call.1} parent=1 // pred_fallthru
      _
    %s31 = sld [smem:[#allocation3]]
    %s32 = sld [smem:[#allocation3 + $0x1]]
    %v33 = vld [vmem:[%s1] sm:$0x3]
    %v34 = vld [vmem:[#allocation4] sm:$0xff]
    %v35 = vld [vmem:[#allocation4 + $0x8] sm:$0xff]
    %v38 = vunpack.c.l.s4 1966171168
    %v39 = vunpack.c.0.s8 %v38
    %v40 = vlaneseq
    %v41 = vshrl.u32 %v40, 7
    %v42 = vsub.s32 %v39, %v41
    %v43 = vrot.slane %v33, %v42
    %v44 = vcombine.high %v43, %v43
    %v46 = vunpack.c.l.s4 1966171168
    %v47 = vunpack.c.0.s8 %v46
    %v48 = vlaneseq
    %v49 = vshrl.u32 %v48, 7
    %v50 = vsub.s32 %v47, %v49
    %v51 = vrot.slane %v43, %v50
    %v53 = vunpack.c.l.s4 1966171168
    %v54 = vunpack.c.0.s8 %v53
    %v55 = vlaneseq
    %v56 = vshrl.u32 %v55, 7
    %v57 = vsub.s32 %v54, %v56
    %v58 = vrot.slane %v44, %v57
    %v59 = vlaneseq
    %v60 = vshrl.u32 %v59, 7
    %v61 = vsub.s32 0, %v60
    %v62 = vrot.slane %v51, %v61
    %v63 = vlaneseq
    %v64 = vshrl.u32 %v63, 7
    %v65 = vsub.s32 0, %v64
    %v66 = vrot.slane %v58, %v65
    %v69 = vsub.f32 %v62, %v34
    %v70 = vsub.f32 %v66, %v35
    %v71 = vmul.f32 %v69, %v69
    %v72 = vmul.f32 %v70, %v70
    %vm73 = vcmask 261120
    %v74 = vsel %vm73, %v71, 0.0
    %75 = vadd.xlane.f32.xlu0 %v74
    %v76 = vpop.xlane.xlu0 %75
    %v77 = vsel %vm73, %v72, 0.0
    %78 = vadd.xlane.f32.xlu0 %v77
    %v79 = vpop.xlane.xlu0 %78
    %v80 = vadd.f32 %v76, 0.0
    %v81 = vadd.f32 %v79, 0.0
    %v82 = vstv %s32
    %v83 = vmul.f32 %v80, %v82
    %v84 = vmul.f32 %v81, %v82
    %v85 = vstv %s31
    %v86 = vsub.f32 %v85, %v83
    %v87 = vsub.f32 %v85, %v84
    %v90 = vlaneseq
    %v91 = vand.u32 %v90, 127
    %v92 = vlaneseq
    %v93 = vshrl.u32 %v92, 7
    %v94 = vsub.s32 %v91, %v93
    %v95 = vrot.slane %v86, %v94
    %v96 = vlaneseq
    %v97 = vshrl.u32 %v96, 7
    %v98 = vsub.s32 %v91, %v97
    %v99 = vrot.slane %v87, %v98
    %vm100 = vcmask 1041409
    %v101 = vsel %vm100, %v99, %v95
    %vm103 = vcmask 58368
    %104 = vst.msk [vmem:[#allocation7] sm:$0x3] %vm103, %v101
    // Predicated region
    $region14: #{tpu_custom_call.1} parent=1 // pred_check
      _
    $region15: #{tpu_custom_call.1} parent=1 // pred_check_branch
      %106 = sbr.rel (0) target = $region17
    $region16: #{tpu_custom_call.1} parent=1 // pred_region
      %s108 = ssub.s32 32, 32
      %109 = vsyncadd [#allocation6], %s108
      %s111 = sshll.u32 [#allocation7], 4
      %s112 = int_to_ptr.vmem [resolvable:$true] %s111
      %114 = dma.vmem_to_hbm [thread:$0]  %s112, 32, %s3, [#allocation6]
    $region17: #{tpu_custom_call.1} parent=1 // pred_fallthru
      _
    // Predicated region
    $region18: #{tpu_custom_call.1} parent=1 // pred_check
      _
    $region19: #{tpu_custom_call.1} parent=1 // pred_check_branch
      %116 = sbr.rel (0) target = $region21
    $region20: #{tpu_custom_call.1} parent=1 // pred_region
      %117 = dma.done [#allocation6], 32
    $region21: #{tpu_custom_call.1} parent=1 // pred_fallthru
      _
    %118 = vsyncpa [#allocation5], 1
    %119 = vsyncpa [#allocation6], 1

</llo_original>
